<compile_context>
chip_gen: v6e
topology: v6e:2x2x1
jax: 0.10.0
libtpu: 0.0.40
codegen_flags: <defaults>
</compile_context>

<pallas_src>
import functools

import jax
import jax.numpy as jnp
from jax.experimental import pallas as pl
from jax.experimental.pallas import tpu as pltpu

_P = 128  # lane-dense padded feature width (full vreg lane dim)


def _fused_mlp_kernel(x_ref, w_ref, b_ref, o_ref, *, num_linear, in_dim, out_dim):
    """One batch tile through every layer.

    x_ref: (TB, in_dim) f32   -- unpadded input features
    w_ref: (L, P, P)    bf16  -- zero-padded weights, resident in VMEM
    b_ref: (L, 1, P)    f32   -- zero-padded biases
    o_ref: (TB, out_dim)      -- narrow (real-width) output store
    """
    h = x_ref[...]  # f32 (TB, in_dim)
    for l in range(num_linear):
        w = w_ref[l]                 # (P, P) bf16
        if l == 0:
            w = w[:in_dim, :]        # contract only the real input features
        h = jnp.dot(h.astype(jnp.bfloat16), w,
                    preferred_element_type=jnp.float32) + b_ref[l]
        if l < num_linear - 1:
            h = jnp.maximum(h, 0.0)  # ReLU in f32 on the VPU
    # Padded lanes are exactly zero throughout (zero weight rows/cols + zero
    # bias lanes), so slicing the real output columns is exact.
    o_ref[...] = h[:, :out_dim].astype(o_ref.dtype)


def _round_up(x, m):
    return ((x + m - 1) // m) * m


def init_waypoint_mlp_params(key, in_dim, out_dim, hidden_dim, num_layers,
                             dtype=jnp.float32):
    """Mirror WaypointMLP layer shapes: num_layers+1 Linear layers.
    Returns list of (W, b) with W pre-transposed to (fan_in, fan_out)."""
    dims = [in_dim] + [hidden_dim] * num_layers + [out_dim]
    params = []
    for i in range(len(dims) - 1):
        fan_in, fan_out = dims[i], dims[i + 1]
        key, kw, kb = jax.random.split(key, 3)
        bound = 1.0 / jnp.sqrt(fan_in)  # PyTorch nn.Linear default init
        w = jax.random.uniform(kw, (fan_in, fan_out), dtype, -bound, bound)
        b = jax.random.uniform(kb, (1, fan_out), dtype, -bound, bound)
        params.append((w, b))
    return params


def _pack_params(params):
    """Stack + zero-pad all layers: weights -> bf16 (L, P, P), biases -> f32 (L, 1, P)."""
    L = len(params)
    w_all = jnp.zeros((L, _P, _P), jnp.bfloat16)
    b_all = jnp.zeros((L, 1, _P), jnp.float32)
    for i, (w, b) in enumerate(params):
        fi, fo = w.shape
        assert fi <= _P and fo <= _P, "feature dims must be <= 128"
        w_all = w_all.at[i, :fi, :fo].set(w.astype(jnp.bfloat16))
        b_all = b_all.at[i, 0, :fo].set(b.reshape(-1).astype(jnp.float32))
    return w_all, b_all


def waypoint_mlp_forward(x, params, *, tb=None):
    """Fused forward pass of the whole MLP in one pallas_call."""
    B, in_dim = x.shape
    L = len(params)
    out_dim = params[-1][0].shape[1]

    w_all, b_all = _pack_params(params)

    # Batch tile: multiple of 8 sublanes, cap 2048.  If the whole batch would
    # fit one tile, split it into >=2 balanced grid steps so the "parallel"
    # batch axis can be sharded across both TensorCores on v7x.
    cap = 2048
    if tb is None:
        b8 = _round_up(B, 8)
        if b8 <= cap:
            tb = max(8, _round_up(-(-B // 2), 8))
        else:
            tb = cap
    tb = _round_up(tb, 8)
    Bp = _round_up(B, tb)
    grid = (Bp // tb,)

    xf = x.astype(jnp.float32)
    if Bp != B:
        # Pad only the batch dim (cheap: (Bp-B)*in_dim zeros); feature lanes
        # are never materialized wider than in_dim in HBM.
        xf = jnp.pad(xf, ((0, Bp - B), (0, 0)))

    # VMEM budget from the actual footprint (+headroom), not a 16-48 MiB clamp.
    x_bytes = 2 * tb * in_dim * 4        # double-buffered input tile (f32)
    o_bytes = 2 * tb * out_dim * 4       # double-buffered output tile (f32)
    w_bytes = 2 * L * _P * _P * 2        # resident weights (bf16), 2 buffers
    b_bytes = 2 * L * _P * 4             # resident biases (f32)
    h_bytes = 3 * tb * _P * 4            # running activation temps (f32 + bf16 copy)
    footprint = x_bytes + o_bytes + w_bytes + b_bytes + h_bytes
    vmem_limit = int(min(max(2 * footprint, 8 << 20), 32 << 20))

    kernel = functools.partial(_fused_mlp_kernel, num_linear=L,
                               in_dim=in_dim, out_dim=out_dim)
    out = pl.pallas_call(
        kernel,
        out_shape=jax.ShapeDtypeStruct((Bp, out_dim), jnp.float32),
        grid=grid,
        in_specs=[
            pl.BlockSpec((tb, in_dim), lambda i: (i, 0)),    # activations: unpadded, batch-tiled
            pl.BlockSpec((L, _P, _P), lambda i: (0, 0, 0)),  # weights: resident (constant index)
            pl.BlockSpec((L, 1, _P), lambda i: (0, 0, 0)),   # biases: resident
        ],
        out_specs=pl.BlockSpec((tb, out_dim), lambda i: (i, 0)),  # narrow real-width output
        compiler_params=pltpu.CompilerParams(
            dimension_semantics=("parallel",),  # batch axis -> both TCs on v7x
            vmem_limit_bytes=vmem_limit,
        ),
    )(xf, w_all, b_all)

    if Bp != B:
        out = out[:B]
    return out.astype(x.dtype)


def waypoint_mlp_reference(x, params, *, bf16_dots=False):
    """Pure-JAX reference. With bf16_dots=True it mirrors the kernel numerics
    (bf16 operands, f32 accumulation, f32 bias/ReLU)."""
    n = len(params)
    h = x.astype(jnp.float32)
    for i, (w, b) in enumerate(params):
        if bf16_dots:
            h = jnp.dot(h.astype(jnp.bfloat16), w.astype(jnp.bfloat16),
                        preferred_element_type=jnp.float32)
        else:
            h = jnp.dot(h, w.astype(jnp.float32))
        h = h + b.astype(jnp.float32)
        if i < n - 1:
            h = jnp.maximum(h, 0.0)
    return h


if __name__ == "__main__":
    in_dim, out_dim, hidden_dim, num_layers = 16, 4, 32, 3

    key = jax.random.PRNGKey(0)
    key, kx = jax.random.split(key)
    params = init_waypoint_mlp_params(key, in_dim, out_dim, hidden_dim,
                                      num_layers)

    # Small batch (single-tile path, grid=(1,)).
    x = jax.random.normal(kx, (8, in_dim), dtype=jnp.float32)
    out = jax.block_until_ready(waypoint_mlp_forward(x, params))
    ref = waypoint_mlp_reference(x, params, bf16_dots=True)
    assert out.shape == (8, out_dim)
    assert jnp.allclose(out, ref, atol=1e-3, rtol=1e-3), "mismatch vs reference"
    # Loose sanity check against the pure-f32 reference (bf16 matmul error).
    ref32 = waypoint_mlp_reference(x, params, bf16_dots=False)
    assert jnp.allclose(out, ref32, atol=5e-2, rtol=5e-2), "mismatch vs f32 reference"

    # Multi-tile path (grid=(4,)), exercises batch tiling / pipelining.
    key, kx2 = jax.random.split(key)
    x2 = jax.random.normal(kx2, (64, in_dim), dtype=jnp.float32)
    out2 = jax.block_until_ready(waypoint_mlp_forward(x2, params, tb=16))
    ref2 = waypoint_mlp_reference(x2, params, bf16_dots=True)
    assert out2.shape == (64, out_dim)
    assert jnp.allclose(out2, ref2, atol=1e-3, rtol=1e-3), "tiled mismatch"

    # Ragged batch (auto tb -> 2 balanced grid steps, batch-only zero pad).
    key, kx3 = jax.random.split(key)
    x3 = jax.random.normal(kx3, (20, in_dim), dtype=jnp.float32)
    out3 = jax.block_until_ready(waypoint_mlp_forward(x3, params))
    ref3 = waypoint_mlp_reference(x3, params, bf16_dots=True)
    assert out3.shape == (20, out_dim)
    assert jnp.allclose(out3, ref3, atol=1e-3, rtol=1e-3), "ragged mismatch"

    print("KERNEL_OK")
</pallas_src>

<mosaic_0001>
module attributes {stable_mosaic.version = 11 : i64} {
  func.func @_fused_mlp_kernel(%arg0: i32, %arg1: memref<8x16xf32, #tpu.memory_space<vmem>>, %arg2: memref<4x128x128xbf16, #tpu.memory_space<vmem>>, %arg3: memref<4x1x128xf32, #tpu.memory_space<vmem>>, %arg4: memref<8x4xf32, #tpu.memory_space<vmem>>) attributes {dimension_semantics = [#tpu.dimension_semantics<parallel>], iteration_bounds = array<i64: 1>, scalar_prefetch = 0 : i64, scratch_operands = 0 : i64, tpu.core_type = #tpu.core_type<tc>, window_params = [{transform_indices = @transform_0, window_bounds = array<i64: 8, 16>}, {pipeline_mode = #tpu.pipeline_mode<synchronous>, transform_indices = @transform_1, window_bounds = array<i64: 4, 128, 128>}, {pipeline_mode = #tpu.pipeline_mode<synchronous>, transform_indices = @transform_2, window_bounds = array<i64: 4, 1, 128>}, {transform_indices = @transform_3, window_bounds = array<i64: 8, 4>}]} {
    %c0 = arith.constant 0 : index
    %c0_0 = arith.constant 0 : index
    %0 = vector.load %arg1[%c0, %c0_0] : memref<8x16xf32, #tpu.memory_space<vmem>>, vector<8x16xf32>
    %c0_1 = arith.constant 0 : index
    %c0_2 = arith.constant 0 : index
    %c0_3 = arith.constant 0 : index
    %1 = vector.load %arg2[%c0_1, %c0_2, %c0_3] : memref<4x128x128xbf16, #tpu.memory_space<vmem>>, vector<1x128x128xbf16>
    %2 = vector.shape_cast %1 : vector<1x128x128xbf16> to vector<128x128xbf16>
    %3 = vector.extract_strided_slice %2 {offsets = [0, 0], sizes = [16, 128], strides = [1, 1]} : vector<128x128xbf16> to vector<16x128xbf16>
    %4 = arith.truncf %0 : vector<8x16xf32> to vector<8x16xbf16>
    %cst = arith.constant dense<0.000000e+00> : vector<8x128xf32>
    %5 = tpu.matmul %4, %3, %cst {dimension_numbers = #tpu.dot_dimension_numbers<[1], [0], [0], [1], [0, 0, 1, 1], [], []>} : vector<8x16xbf16>, vector<16x128xbf16>, vector<8x128xf32> -> vector<8x128xf32>
    %c0_4 = arith.constant 0 : index
    %c0_5 = arith.constant 0 : index
    %c0_6 = arith.constant 0 : index
    %6 = vector.load %arg3[%c0_4, %c0_5, %c0_6] : memref<4x1x128xf32, #tpu.memory_space<vmem>>, vector<1x1x128xf32>
    %7 = vector.shape_cast %6 : vector<1x1x128xf32> to vector<1x128xf32>
    %8 = vector.broadcast %7 : vector<1x128xf32> to vector<8x128xf32>
    %9 = arith.addf %5, %8 : vector<8x128xf32>
    %cst_7 = arith.constant 0.000000e+00 : f32
    %10 = vector.broadcast %cst_7 : f32 to vector<8x128xf32>
    %11 = arith.maximumf %9, %10 : vector<8x128xf32>
    %c1 = arith.constant 1 : index
    %c0_8 = arith.constant 0 : index
    %c0_9 = arith.constant 0 : index
    %12 = vector.load %arg2[%c1, %c0_8, %c0_9] : memref<4x128x128xbf16, #tpu.memory_space<vmem>>, vector<1x128x128xbf16>
    %13 = vector.shape_cast %12 : vector<1x128x128xbf16> to vector<128x128xbf16>
    %14 = arith.truncf %11 : vector<8x128xf32> to vector<8x128xbf16>
    %cst_10 = arith.constant dense<0.000000e+00> : vector<8x128xf32>
    %15 = tpu.matmul %14, %13, %cst_10 {dimension_numbers = #tpu.dot_dimension_numbers<[1], [0], [0], [1], [0, 0, 1, 1], [], []>} : vector<8x128xbf16>, vector<128x128xbf16>, vector<8x128xf32> -> vector<8x128xf32>
    %c1_11 = arith.constant 1 : index
    %c0_12 = arith.constant 0 : index
    %c0_13 = arith.constant 0 : index
    %16 = vector.load %arg3[%c1_11, %c0_12, %c0_13] : memref<4x1x128xf32, #tpu.memory_space<vmem>>, vector<1x1x128xf32>
    %17 = vector.shape_cast %16 : vector<1x1x128xf32> to vector<1x128xf32>
    %18 = vector.broadcast %17 : vector<1x128xf32> to vector<8x128xf32>
    %19 = arith.addf %15, %18 : vector<8x128xf32>
    %cst_14 = arith.constant 0.000000e+00 : f32
    %20 = vector.broadcast %cst_14 : f32 to vector<8x128xf32>
    %21 = arith.maximumf %19, %20 : vector<8x128xf32>
    %c2 = arith.constant 2 : index
    %c0_15 = arith.constant 0 : index
    %c0_16 = arith.constant 0 : index
    %22 = vector.load %arg2[%c2, %c0_15, %c0_16] : memref<4x128x128xbf16, #tpu.memory_space<vmem>>, vector<1x128x128xbf16>
    %23 = vector.shape_cast %22 : vector<1x128x128xbf16> to vector<128x128xbf16>
    %24 = arith.truncf %21 : vector<8x128xf32> to vector<8x128xbf16>
    %cst_17 = arith.constant dense<0.000000e+00> : vector<8x128xf32>
    %25 = tpu.matmul %24, %23, %cst_17 {dimension_numbers = #tpu.dot_dimension_numbers<[1], [0], [0], [1], [0, 0, 1, 1], [], []>} : vector<8x128xbf16>, vector<128x128xbf16>, vector<8x128xf32> -> vector<8x128xf32>
    %c2_18 = arith.constant 2 : index
    %c0_19 = arith.constant 0 : index
    %c0_20 = arith.constant 0 : index
    %26 = vector.load %arg3[%c2_18, %c0_19, %c0_20] : memref<4x1x128xf32, #tpu.memory_space<vmem>>, vector<1x1x128xf32>
    %27 = vector.shape_cast %26 : vector<1x1x128xf32> to vector<1x128xf32>
    %28 = vector.broadcast %27 : vector<1x128xf32> to vector<8x128xf32>
    %29 = arith.addf %25, %28 : vector<8x128xf32>
    %cst_21 = arith.constant 0.000000e+00 : f32
    %30 = vector.broadcast %cst_21 : f32 to vector<8x128xf32>
    %31 = arith.maximumf %29, %30 : vector<8x128xf32>
    %c3 = arith.constant 3 : index
    %c0_22 = arith.constant 0 : index
    %c0_23 = arith.constant 0 : index
    %32 = vector.load %arg2[%c3, %c0_22, %c0_23] : memref<4x128x128xbf16, #tpu.memory_space<vmem>>, vector<1x128x128xbf16>
    %33 = vector.shape_cast %32 : vector<1x128x128xbf16> to vector<128x128xbf16>
    %34 = arith.truncf %31 : vector<8x128xf32> to vector<8x128xbf16>
    %cst_24 = arith.constant dense<0.000000e+00> : vector<8x128xf32>
    %35 = tpu.matmul %34, %33, %cst_24 {dimension_numbers = #tpu.dot_dimension_numbers<[1], [0], [0], [1], [0, 0, 1, 1], [], []>} : vector<8x128xbf16>, vector<128x128xbf16>, vector<8x128xf32> -> vector<8x128xf32>
    %c3_25 = arith.constant 3 : index
    %c0_26 = arith.constant 0 : index
    %c0_27 = arith.constant 0 : index
    %36 = vector.load %arg3[%c3_25, %c0_26, %c0_27] : memref<4x1x128xf32, #tpu.memory_space<vmem>>, vector<1x1x128xf32>
    %37 = vector.shape_cast %36 : vector<1x1x128xf32> to vector<1x128xf32>
    %38 = vector.broadcast %37 : vector<1x128xf32> to vector<8x128xf32>
    %39 = arith.addf %35, %38 : vector<8x128xf32>
    %40 = vector.extract_strided_slice %39 {offsets = [0, 0], sizes = [8, 4], strides = [1, 1]} : vector<8x128xf32> to vector<8x4xf32>
    %c0_28 = arith.constant 0 : index
    %c0_29 = arith.constant 0 : index
    %41 = vector.load %arg4[%c0_28, %c0_29] : memref<8x4xf32, #tpu.memory_space<vmem>>, vector<8x4xf32>
    tpu.vector_store %arg4[%c0_28, %c0_29], %40 {strides = array<i32>} : memref<8x4xf32, #tpu.memory_space<vmem>>, vector<8x4xf32>,
    return
  }
  func.func @transform_0(%arg0: i32) -> (i32, i32) {
    %c0_i32 = arith.constant 0 : i32
    %c0_i32_0 = arith.constant 0 : i32
    return %arg0, %c0_i32 : i32, i32
  }
  func.func @transform_1(%arg0: i32) -> (i32, i32, i32) {
    %c0_i32 = arith.constant 0 : i32
    %c0_i32_0 = arith.constant 0 : i32
    %c0_i32_1 = arith.constant 0 : i32
    %c0_i32_2 = arith.constant 0 : i32
    return %c0_i32, %c0_i32_0, %c0_i32_1 : i32, i32, i32
  }
  func.func @transform_2(%arg0: i32) -> (i32, i32, i32) {
    %c0_i32 = arith.constant 0 : i32
    %c0_i32_0 = arith.constant 0 : i32
    %c0_i32_1 = arith.constant 0 : i32
    %c0_i32_2 = arith.constant 0 : i32
    return %c0_i32, %c0_i32_0, %c0_i32_1 : i32, i32, i32
  }
  func.func @transform_3(%arg0: i32) -> (i32, i32) {
    %c0_i32 = arith.constant 0 : i32
    %c0_i32_0 = arith.constant 0 : i32
    return %arg0, %c0_i32 : i32, i32
  }
}

</mosaic_0001>

<llo_original>
// kernel: tpu_custom_call.1
$region0: #{tpu_custom_call.1}
  #allocation0 [shape = 'u32[]', space=smem, size = 0x4, offset = 0x4, fixed_abs, tag = 'smem constant byte address 0x4 - core index']
  #allocation1 [shape = 'u32[144,128]{1,0:T(1,128)}', space=vmem, size = 0x12000, scoped, tag = 'internal scratch']
  %s0 = inlined_call_operand.hbm [shape: f32[8,16], index: 0, kind: input, shape index: {}]
  %s1 = inlined_call_operand.hbm [shape: bf16[4,128,128], index: 1, kind: input, shape index: {}]
  %s2 = inlined_call_operand.hbm [shape: f32[4,1,128], index: 2, kind: input, shape index: {}]
  %s3 = inlined_call_operand.vmem [shape: f32[8,4], index: 3, kind: output, shape index: {}]
  %s4 = sld [smem:[#allocation0]]
  $region34: #{tpu_custom_call.1} parent=0
    _
  %s6 = ssub.s32 1, %s4
  %s7 = scalar_select 0, %s6, %s4
  $region1: #{tpu_custom_call.1} parent=0
    #allocation2 [shape = 'u8[4096]{0}', space=vmem, size = 0x1000, scoped, tag = 'input window, operand 0, single buffered']
    #allocation3 [shape = 's32[1]{0}', space=sflag, size = 0x4, scoped, tag = 'scoped memory for tpu_custom_call.1']
    #allocation4 [shape = 'u8[131072]{0}', space=vmem, size = 0x20000, scoped, tag = 'input window, operand 1, single buffered']
    #allocation5 [shape = 's32[1]{0}', space=sflag, size = 0x4, scoped, tag = 'scoped memory for tpu_custom_call.1']
    #allocation6 [shape = 'u8[2048]{0}', space=vmem, size = 0x800, scoped, tag = 'input window, operand 2, single buffered']
    %8 = vsyncpa [#allocation3], 0
    %9 = vsyncpa [#allocation5], 0
    // Predicated region
    $region2: #{tpu_custom_call.1} parent=1 // pred_check
      _
    $region3: #{tpu_custom_call.1} parent=1 // pred_check_branch
      %11 = sbr.rel (0) target = $region5
    $region4: #{tpu_custom_call.1} parent=1 // pred_region
      %s13 = ssub.s32 128, 128
      %14 = vsyncadd [#allocation3], %s13
      %s16 = sshll.u32 [#allocation2], 4
      %s17 = int_to_ptr.vmem [resolvable:$true] %s16
      %19 = dma.hbm_to_vmem [thread:$0]  %s0, 128, %s17, [#allocation3]
    $region5: #{tpu_custom_call.1} parent=1 // pred_fallthru
      _
    // Predicated region
    $region6: #{tpu_custom_call.1} parent=1 // pred_check
      _
    $region7: #{tpu_custom_call.1} parent=1 // pred_check_branch
      %21 = sbr.rel (0) target = $region9
    $region8: #{tpu_custom_call.1} parent=1 // pred_region
      %s23 = ssub.s32 4096, 4096
      %24 = vsyncadd [#allocation5], %s23
      %s25 = sshll.u32 [#allocation4], 4
      %s26 = int_to_ptr.vmem [resolvable:$true] %s25
      %31 = dma.hbm_to_vmem [thread:$0]  %s1, 4096, %s26, [#allocation5], 64, 64, 4
    $region9: #{tpu_custom_call.1} parent=1 // pred_fallthru
      _
    // Predicated region
    $region10: #{tpu_custom_call.1} parent=1 // pred_check
      _
    $region11: #{tpu_custom_call.1} parent=1 // pred_check_branch
      %33 = sbr.rel (0) target = $region13
    $region12: #{tpu_custom_call.1} parent=1 // pred_region
      %s35 = ssub.s32 64, 64
      %36 = vsyncadd [#allocation5], %s35
      %s37 = sshll.u32 [#allocation6], 4
      %s38 = int_to_ptr.vmem [resolvable:$true] %s37
      %43 = dma.hbm_to_vmem [thread:$0]  %s2, 64, %s38, [#allocation5], 16, 16, 1
    $region13: #{tpu_custom_call.1} parent=1 // pred_fallthru
      _
    // Predicated region
    $region14: #{tpu_custom_call.1} parent=1 // pred_check
      _
    $region15: #{tpu_custom_call.1} parent=1 // pred_check_branch
      %45 = sbr.rel (0) target = $region17
    $region16: #{tpu_custom_call.1} parent=1 // pred_region
      %46 = dma.done [#allocation3], 128
    $region17: #{tpu_custom_call.1} parent=1 // pred_fallthru
      _
    // Predicated region
    $region18: #{tpu_custom_call.1} parent=1 // pred_check
      _
    $region19: #{tpu_custom_call.1} parent=1 // pred_check_branch
      %48 = sbr.rel (0) target = $region21
    $region20: #{tpu_custom_call.1} parent=1 // pred_region
      %49 = dma.done [#allocation5], 4096
    $region21: #{tpu_custom_call.1} parent=1 // pred_fallthru
      _
    // Predicated region
    $region22: #{tpu_custom_call.1} parent=1 // pred_check
      _
    $region23: #{tpu_custom_call.1} parent=1 // pred_check_branch
      %51 = sbr.rel (0) target = $region25
    $region24: #{tpu_custom_call.1} parent=1 // pred_region
      %52 = dma.done [#allocation5], 64
    $region25: #{tpu_custom_call.1} parent=1 // pred_fallthru
      _
    %v54 = vld [vmem:[#allocation2] sm:$0xff]
    %v55 = vld [vmem:[#allocation4] sm:$0xf]
    %v56 = vld [vmem:[#allocation4 + $0x4] sm:$0xf]
    %v57 = vpack.c.bf16 %v54, %v54
    %v58 = vld [vmem:[#allocation6] sm:$0x1]
    %v60 = vlaneseq
    %v61 = vshrl.u32 %v60, 7
    %v62 = vsub.s32 0, %v61
    %v63 = vrot.slane %v58, %v62
    %v67 = vunpack.c.l.b16 %v55
    %v68 = vunpack.c.l.b16 %v56
    %v69 = vpack.c.b16 %v68, %v67
    %vm71 = vcmask 130048
    %v73 = vsel %vm71, %v57, 0
    %75 = vmatprep.subr.bf16.mxu0 0
    %76 = vmatpush1.bf16.msra.mxu0 0
    %77 = vmatprep.subr.bf16.mxu0 0
    %78 = vmatpush1.bf16.msra.mxu0 0
    %79 = vmatprep.subr.bf16.mxu0 0
    %80 = vmatpush1.bf16.msra.mxu0 0
    %81 = vmatprep.subr.bf16.mxu0 0
    %82 = vmatpush1.bf16.msra.mxu0 0
    %83 = vmatprep.subr.bf16.mxu0 0
    %84 = vmatpush1.bf16.msra.mxu0 0
    %85 = vmatprep.subr.bf16.mxu0 0
    %86 = vmatpush1.bf16.msra.mxu0 0
    %87 = vmatprep.subr.bf16.mxu0 0
    %88 = vmatpush1.bf16.msra.mxu0 0
    %89 = vmatprep.subr.bf16.mxu0 0
    %90 = vmatpush1.bf16.msra.mxu0 %v69
    %91 = vmatprep.subr.bf16.mxu0 0
    %92 = vmatpush2.bf16.msra.mxu0 0
    %93 = vmatprep.subr.bf16.mxu0 0
    %94 = vmatpush2.bf16.msra.mxu0 0
    %95 = vmatprep.subr.bf16.mxu0 0
    %96 = vmatpush2.bf16.msra.mxu0 0
    %97 = vmatprep.subr.bf16.mxu0 0
    %98 = vmatpush2.bf16.msra.mxu0 0
    %99 = vmatprep.subr.bf16.mxu0 0
    %100 = vmatpush2.bf16.msra.mxu0 0
    %101 = vmatprep.subr.bf16.mxu0 0
    %102 = vmatpush2.bf16.msra.mxu0 0
    %103 = vmatprep.subr.bf16.mxu0 0
    %104 = vmatpush2.bf16.msra.mxu0 0
    %105 = vmatprep.subr.bf16.mxu0 0
    %106 = vmatpush2.bf16.msra.mxu0 0
    %107 = vmatprep.mubr.bf16.mxu0 0
    %108 = vmatmul.mubr.bf16.gmra.mxu0 %v73
    %v109 = vpop.f32.mrf.mxu0
    %v110 = vadd.f32 %v63, %v109
    %v111 = vpop.f32.mrf.mxu0
    %v112 = vpop.f32.mrf.mxu0
    %v113 = vpop.f32.mrf.mxu0
    %114 = vdwg.mxu0
    %v115 = vmax.f32 %v110, 0.0
    %s116 = scalar_lea.vmem [#allocation4], 64
    %v117 = vld [vmem:[%s116] sm:$0xf]
    %v118 = vld [vmem:[%s116 + $0x4] sm:$0xf]
    %v119 = vld [vmem:[%s116 + $0x8] sm:$0xf]
    %v120 = vld [vmem:[%s116 + $0xc] sm:$0xf]
    %v121 = vld [vmem:[%s116 + $0x10] sm:$0xf]
    %v122 = vld [vmem:[%s116 + $0x14] sm:$0xf]
    %v123 = vld [vmem:[%s116 + $0x18] sm:$0xf]
    %v124 = vld [vmem:[%s116 + $0x1c] sm:$0xf]
    %v125 = vld [vmem:[%s116 + $0x20] sm:$0xf]
    %v126 = vld [vmem:[%s116 + $0x24] sm:$0xf]
    %v127 = vld [vmem:[%s116 + $0x28] sm:$0xf]
    %v128 = vld [vmem:[%s116 + $0x2c] sm:$0xf]
    %v129 = vld [vmem:[%s116 + $0x30] sm:$0xf]
    %v130 = vld [vmem:[%s116 + $0x34] sm:$0xf]
    %v131 = vld [vmem:[%s116 + $0x38] sm:$0xf]
    %v132 = vld [vmem:[%s116 + $0x3c] sm:$0xf]
    %v133 = vpack.c.bf16 %v115, %v115
    %s134 = scalar_lea.vmem [#allocation6], 1
    %v135 = vld [vmem:[%s134] sm:$0x1]
    %v137 = vlaneseq
    %v138 = vshrl.u32 %v137, 7
    %v139 = vsub.s32 0, %v138
    %v140 = vrot.slane %v135, %v139
    %v158 = vunpack.c.l.b16 %v117
    %v159 = vunpack.c.l.b16 %v118
    %v160 = vunpack.c.l.b16 %v119
    %v161 = vunpack.c.l.b16 %v120
    %v162 = vunpack.c.l.b16 %v121
    %v163 = vunpack.c.l.b16 %v122
    %v164 = vunpack.c.l.b16 %v123
    %v165 = vunpack.c.l.b16 %v124
    %v166 = vunpack.c.l.b16 %v125
    %v167 = vunpack.c.l.b16 %v126
    %v168 = vunpack.c.l.b16 %v127
    %v169 = vunpack.c.l.b16 %v128
    %v170 = vunpack.c.l.b16 %v129
    %v171 = vunpack.c.l.b16 %v130
    %v172 = vunpack.c.l.b16 %v131
    %v173 = vunpack.c.l.b16 %v132
    %v174 = vpack.c.b16 %v159, %v158
    %v175 = vpack.c.b16 %v161, %v160
    %v176 = vpack.c.b16 %v163, %v162
    %v177 = vpack.c.b16 %v165, %v164
    %v178 = vpack.c.b16 %v167, %v166
    %v179 = vpack.c.b16 %v169, %v168
    %v180 = vpack.c.b16 %v171, %v170
    %v181 = vpack.c.b16 %v173, %v172
    %190 = vmatprep.subr.bf16.mxu0 0
    %191 = vmatpush1.bf16.msra.mxu0 %v181
    %192 = vmatprep.subr.bf16.mxu0 0
    %193 = vmatpush1.bf16.msra.mxu0 %v180
    %194 = vmatprep.subr.bf16.mxu0 0
    %195 = vmatpush1.bf16.msra.mxu0 %v179
    %196 = vmatprep.subr.bf16.mxu0 0
    %197 = vmatpush1.bf16.msra.mxu0 %v178
    %198 = vmatprep.subr.bf16.mxu0 0
    %199 = vmatpush1.bf16.msra.mxu0 %v177
    %200 = vmatprep.subr.bf16.mxu0 0
    %201 = vmatpush1.bf16.msra.mxu0 %v176
    %202 = vmatprep.subr.bf16.mxu0 0
    %203 = vmatpush1.bf16.msra.mxu0 %v175
    %204 = vmatprep.subr.bf16.mxu0 0
    %205 = vmatpush1.bf16.msra.mxu0 %v174
    %206 = vmatprep.subr.bf16.mxu0 0
    %207 = vmatpush2.bf16.msra.mxu0 0
    %208 = vmatprep.subr.bf16.mxu0 0
    %209 = vmatpush2.bf16.msra.mxu0 0
    %210 = vmatprep.subr.bf16.mxu0 0
    %211 = vmatpush2.bf16.msra.mxu0 0
    %212 = vmatprep.subr.bf16.mxu0 0
    %213 = vmatpush2.bf16.msra.mxu0 0
    %214 = vmatprep.subr.bf16.mxu0 0
    %215 = vmatpush2.bf16.msra.mxu0 0
    %216 = vmatprep.subr.bf16.mxu0 0
    %217 = vmatpush2.bf16.msra.mxu0 0
    %218 = vmatprep.subr.bf16.mxu0 0
    %219 = vmatpush2.bf16.msra.mxu0 0
    %220 = vmatprep.subr.bf16.mxu0 0
    %221 = vmatpush2.bf16.msra.mxu0 0
    %222 = vmatprep.mubr.bf16.mxu0 0
    %223 = vmatmul.mubr.bf16.gmra.mxu0 %v133
    %v224 = vpop.f32.mrf.mxu0
    %v225 = vadd.f32 %v140, %v224
    %v226 = vpop.f32.mrf.mxu0
    %v227 = vpop.f32.mrf.mxu0
    %v228 = vpop.f32.mrf.mxu0
    %229 = vdwg.mxu0
    %v230 = vmax.f32 %v225, 0.0
    %s231 = scalar_lea.vmem [#allocation4], 128
    %v232 = vld [vmem:[%s231] sm:$0xf]
    %v233 = vld [vmem:[%s231 + $0x4] sm:$0xf]
    %v234 = vld [vmem:[%s231 + $0x8] sm:$0xf]
    %v235 = vld [vmem:[%s231 + $0xc] sm:$0xf]
    %v236 = vld [vmem:[%s231 + $0x10] sm:$0xf]
    %v237 = vld [vmem:[%s231 + $0x14] sm:$0xf]
    %v238 = vld [vmem:[%s231 + $0x18] sm:$0xf]
    %v239 = vld [vmem:[%s231 + $0x1c] sm:$0xf]
    %v240 = vld [vmem:[%s231 + $0x20] sm:$0xf]
    %v241 = vld [vmem:[%s231 + $0x24] sm:$0xf]
    %v242 = vld [vmem:[%s231 + $0x28] sm:$0xf]
    %v243 = vld [vmem:[%s231 + $0x2c] sm:$0xf]
    %v244 = vld [vmem:[%s231 + $0x30] sm:$0xf]
    %v245 = vld [vmem:[%s231 + $0x34] sm:$0xf]
    %v246 = vld [vmem:[%s231 + $0x38] sm:$0xf]
    %v247 = vld [vmem:[%s231 + $0x3c] sm:$0xf]
    %v248 = vpack.c.bf16 %v230, %v230
    %s249 = scalar_lea.vmem [#allocation6], 2
    %v250 = vld [vmem:[%s249] sm:$0x1]
    %v252 = vlaneseq
    %v253 = vshrl.u32 %v252, 7
    %v254 = vsub.s32 0, %v253
    %v255 = vrot.slane %v250, %v254
    %v273 = vunpack.c.l.b16 %v232
    %v274 = vunpack.c.l.b16 %v233
    %v275 = vunpack.c.l.b16 %v234
    %v276 = vunpack.c.l.b16 %v235
    %v277 = vunpack.c.l.b16 %v236
    %v278 = vunpack.c.l.b16 %v237
    %v279 = vunpack.c.l.b16 %v238
    %v280 = vunpack.c.l.b16 %v239
    %v281 = vunpack.c.l.b16 %v240
    %v282 = vunpack.c.l.b16 %v241
    %v283 = vunpack.c.l.b16 %v242
    %v284 = vunpack.c.l.b16 %v243
    %v285 = vunpack.c.l.b16 %v244
    %v286 = vunpack.c.l.b16 %v245
    %v287 = vunpack.c.l.b16 %v246
    %v288 = vunpack.c.l.b16 %v247
    %v289 = vpack.c.b16 %v274, %v273
    %v290 = vpack.c.b16 %v276, %v275
    %v291 = vpack.c.b16 %v278, %v277
    %v292 = vpack.c.b16 %v280, %v279
    %v293 = vpack.c.b16 %v282, %v281
    %v294 = vpack.c.b16 %v284, %v283
    %v295 = vpack.c.b16 %v286, %v285
    %v296 = vpack.c.b16 %v288, %v287
    %305 = vmatprep.subr.bf16.mxu0 0
    %306 = vmatpush1.bf16.msra.mxu0 %v296
    %307 = vmatprep.subr.bf16.mxu0 0
    %308 = vmatpush1.bf16.msra.mxu0 %v295
    %309 = vmatprep.subr.bf16.mxu0 0
    %310 = vmatpush1.bf16.msra.mxu0 %v294
    %311 = vmatprep.subr.bf16.mxu0 0
    %312 = vmatpush1.bf16.msra.mxu0 %v293
    %313 = vmatprep.subr.bf16.mxu0 0
    %314 = vmatpush1.bf16.msra.mxu0 %v292
    %315 = vmatprep.subr.bf16.mxu0 0
    %316 = vmatpush1.bf16.msra.mxu0 %v291
    %317 = vmatprep.subr.bf16.mxu0 0
    %318 = vmatpush1.bf16.msra.mxu0 %v290
    %319 = vmatprep.subr.bf16.mxu0 0
    %320 = vmatpush1.bf16.msra.mxu0 %v289
    %321 = vmatprep.subr.bf16.mxu0 0
    %322 = vmatpush2.bf16.msra.mxu0 0
    %323 = vmatprep.subr.bf16.mxu0 0
    %324 = vmatpush2.bf16.msra.mxu0 0
    %325 = vmatprep.subr.bf16.mxu0 0
    %326 = vmatpush2.bf16.msra.mxu0 0
    %327 = vmatprep.subr.bf16.mxu0 0
    %328 = vmatpush2.bf16.msra.mxu0 0
    %329 = vmatprep.subr.bf16.mxu0 0
    %330 = vmatpush2.bf16.msra.mxu0 0
    %331 = vmatprep.subr.bf16.mxu0 0
    %332 = vmatpush2.bf16.msra.mxu0 0
    %333 = vmatprep.subr.bf16.mxu0 0
    %334 = vmatpush2.bf16.msra.mxu0 0
    %335 = vmatprep.subr.bf16.mxu0 0
    %336 = vmatpush2.bf16.msra.mxu0 0
    %337 = vmatprep.mubr.bf16.mxu0 0
    %338 = vmatmul.mubr.bf16.gmra.mxu0 %v248
    %v339 = vpop.f32.mrf.mxu0
    %v340 = vadd.f32 %v255, %v339
    %v341 = vpop.f32.mrf.mxu0
    %v342 = vpop.f32.mrf.mxu0
    %v343 = vpop.f32.mrf.mxu0
    %344 = vdwg.mxu0
    %v345 = vmax.f32 %v340, 0.0
    %s346 = scalar_lea.vmem [#allocation4], 192
    %v347 = vld [vmem:[%s346] sm:$0xf]
    %v348 = vld [vmem:[%s346 + $0x4] sm:$0xf]
    %v349 = vld [vmem:[%s346 + $0x8] sm:$0xf]
    %v350 = vld [vmem:[%s346 + $0xc] sm:$0xf]
    %v351 = vld [vmem:[%s346 + $0x10] sm:$0xf]
    %v352 = vld [vmem:[%s346 + $0x14] sm:$0xf]
    %v353 = vld [vmem:[%s346 + $0x18] sm:$0xf]
    %v354 = vld [vmem:[%s346 + $0x1c] sm:$0xf]
    %v355 = vld [vmem:[%s346 + $0x20] sm:$0xf]
    %v356 = vld [vmem:[%s346 + $0x24] sm:$0xf]
    %v357 = vld [vmem:[%s346 + $0x28] sm:$0xf]
    %v358 = vld [vmem:[%s346 + $0x2c] sm:$0xf]
    %v359 = vld [vmem:[%s346 + $0x30] sm:$0xf]
    %v360 = vld [vmem:[%s346 + $0x34] sm:$0xf]
    %v361 = vld [vmem:[%s346 + $0x38] sm:$0xf]
    %v362 = vld [vmem:[%s346 + $0x3c] sm:$0xf]
    %v363 = vpack.c.bf16 %v345, %v345
    %s364 = scalar_lea.vmem [#allocation6], 3
    %v365 = vld [vmem:[%s364] sm:$0x1]
    %v367 = vlaneseq
    %v368 = vshrl.u32 %v367, 7
    %v369 = vsub.s32 0, %v368
    %v370 = vrot.slane %v365, %v369
    %v388 = vunpack.c.l.b16 %v347
    %v389 = vunpack.c.l.b16 %v348
    %v390 = vunpack.c.l.b16 %v349
    %v391 = vunpack.c.l.b16 %v350
    %v392 = vunpack.c.l.b16 %v351
    %v393 = vunpack.c.l.b16 %v352
    %v394 = vunpack.c.l.b16 %v353
    %v395 = vunpack.c.l.b16 %v354
    %v396 = vunpack.c.l.b16 %v355
    %v397 = vunpack.c.l.b16 %v356
    %v398 = vunpack.c.l.b16 %v357
    %v399 = vunpack.c.l.b16 %v358
    %v400 = vunpack.c.l.b16 %v359
    %v401 = vunpack.c.l.b16 %v360
    %v402 = vunpack.c.l.b16 %v361
    %v403 = vunpack.c.l.b16 %v362
    %v404 = vpack.c.b16 %v389, %v388
    %v405 = vpack.c.b16 %v391, %v390
    %v406 = vpack.c.b16 %v393, %v392
    %v407 = vpack.c.b16 %v395, %v394
    %v408 = vpack.c.b16 %v397, %v396
    %v409 = vpack.c.b16 %v399, %v398
    %v410 = vpack.c.b16 %v401, %v400
    %v411 = vpack.c.b16 %v403, %v402
    %420 = vmatprep.subr.bf16.mxu0 0
    %421 = vmatpush1.bf16.msra.mxu0 %v411
    %422 = vmatprep.subr.bf16.mxu0 0
    %423 = vmatpush1.bf16.msra.mxu0 %v410
    %424 = vmatprep.subr.bf16.mxu0 0
    %425 = vmatpush1.bf16.msra.mxu0 %v409
    %426 = vmatprep.subr.bf16.mxu0 0
    %427 = vmatpush1.bf16.msra.mxu0 %v408
    %428 = vmatprep.subr.bf16.mxu0 0
    %429 = vmatpush1.bf16.msra.mxu0 %v407
    %430 = vmatprep.subr.bf16.mxu0 0
    %431 = vmatpush1.bf16.msra.mxu0 %v406
    %432 = vmatprep.subr.bf16.mxu0 0
    %433 = vmatpush1.bf16.msra.mxu0 %v405
    %434 = vmatprep.subr.bf16.mxu0 0
    %435 = vmatpush1.bf16.msra.mxu0 %v404
    %436 = vmatprep.subr.bf16.mxu0 0
    %437 = vmatpush2.bf16.msra.mxu0 0
    %438 = vmatprep.subr.bf16.mxu0 0
    %439 = vmatpush2.bf16.msra.mxu0 0
    %440 = vmatprep.subr.bf16.mxu0 0
    %441 = vmatpush2.bf16.msra.mxu0 0
    %442 = vmatprep.subr.bf16.mxu0 0
    %443 = vmatpush2.bf16.msra.mxu0 0
    %444 = vmatprep.subr.bf16.mxu0 0
    %445 = vmatpush2.bf16.msra.mxu0 0
    %446 = vmatprep.subr.bf16.mxu0 0
    %447 = vmatpush2.bf16.msra.mxu0 0
    %448 = vmatprep.subr.bf16.mxu0 0
    %449 = vmatpush2.bf16.msra.mxu0 0
    %450 = vmatprep.subr.bf16.mxu0 0
    %451 = vmatpush2.bf16.msra.mxu0 0
    %452 = vmatprep.mubr.bf16.mxu0 0
    %453 = vmatmul.mubr.bf16.gmra.mxu0 %v363
    %v454 = vpop.f32.mrf.mxu0
    %v455 = vadd.f32 %v370, %v454
    %v456 = vpop.f32.mrf.mxu0
    %v457 = vpop.f32.mrf.mxu0
    %v458 = vpop.f32.mrf.mxu0
    %459 = vdwg.mxu0
    %vm460 = vcmask 31744
    %461 = vst.msk [vmem:[%s3] sm:$0xff] %vm460, %v455
    // Predicated region
    $region26: #{tpu_custom_call.1} parent=1 // pred_check
      _
    $region27: #{tpu_custom_call.1} parent=1 // pred_check_branch
      %463 = sbr.rel (0) target = $region29
    $region28: #{tpu_custom_call.1} parent=1 // pred_region
      _
    $region29: #{tpu_custom_call.1} parent=1 // pred_fallthru
      _
    // Predicated region
    $region30: #{tpu_custom_call.1} parent=1 // pred_check
      _
    $region31: #{tpu_custom_call.1} parent=1 // pred_check_branch
      %465 = sbr.rel (0) target = $region33
    $region32: #{tpu_custom_call.1} parent=1 // pred_region
      _
    $region33: #{tpu_custom_call.1} parent=1 // pred_fallthru
      _
    %466 = vsyncpa [#allocation3], 1
    %467 = vsyncpa [#allocation5], 1

</llo_original>
